<compile_context>
chip_gen: v6e
topology: v6e:2x2x1
jax: 0.10.0
libtpu: 0.0.40
codegen_flags: <defaults>
</compile_context>

<pallas_src>
import functools
import math

import jax
import jax.numpy as jnp
from jax.experimental import pallas as pl
from jax.experimental.pallas import tpu as pltpu

NEG_SLOPE = 0.01      # nn.LeakyReLU default negative_slope
NEG_INF = -1e30       # finite "minus infinity" so masked-row math stays NaN-free


def _round_up(x, m):
    return ((x + m - 1) // m) * m


# --------------------------------------------------------------------------
# Kernel 1: fused node projection (row-tiled).
#   h_pad[i]  = x[i] @ W_pad + b_pad     [TM, F_PAD]  bf16 (lane-dense)
#   s12[i]    = x[i] @ Wa    + ba        [TM, 2]      f32  (a1/a2 folded into W)
# Compute stays in f32; only the stored h is bf16.
# --------------------------------------------------------------------------
def proj_kernel(x_ref, w_ref, b_ref, wa_ref, ba_ref, h_ref, s_ref):
    x = x_ref[...]
    h = jnp.dot(x, w_ref[...], preferred_element_type=jnp.float32) + b_ref[...]
    h_ref[...] = h.astype(h_ref.dtype)
    s_ref[...] = jnp.dot(x, wa_ref[...], preferred_element_type=jnp.float32) + ba_ref[...]


# --------------------------------------------------------------------------
# Kernel 2: masked attention with online (flash-style) softmax.
# grid = (rows, cols); cols is the reduction axis (last, "arbitrary").
# occ_ref: scalar-prefetched per-tile edge counts (SMEM) -> skip empty tiles.
# --------------------------------------------------------------------------
def attn_kernel(occ_ref, s1_ref, s2_ref, adj_ref, h_ref, out_ref,
                m_sc, l_sc, acc_sc, *, n_col_blocks, h_resident):
    i = pl.program_id(0)
    j = pl.program_id(1)

    @pl.when(j == 0)
    def _():
        m_sc[...] = jnp.full_like(m_sc, NEG_INF)
        l_sc[...] = jnp.zeros_like(l_sc)
        acc_sc[...] = jnp.zeros_like(acc_sc)

    # Skip all compute on tiles with no edges (exactly equivalent: an empty
    # tile contributes alpha=1, p=0 to the online softmax state).
    @pl.when(occ_ref[i * n_col_blocks + j] > 0)
    def _():
        # scores[r, c] = s1[r] + s2[c]: plain lane/sublane broadcast, no MXU,
        # no N^2 temporaries beyond the (TM, TN) tile.
        scores = s1_ref[...] + s2_ref[...]                           # (TM, TN) f32
        scores = jnp.where(scores >= 0, scores, NEG_SLOPE * scores)  # LeakyReLU
        mask = adj_ref[...] > 0                                      # int8 0/1 mask
        masked = jnp.where(mask, scores, NEG_INF)

        m_prev = m_sc[...]
        m_new = jnp.maximum(m_prev, jnp.max(masked, axis=1, keepdims=True))
        alpha = jnp.exp(m_prev - m_new)                              # rescale old state
        p = jnp.where(mask, jnp.exp(masked - m_new), 0.0)            # unnormalized weights (f32)
        l_sc[...] = alpha * l_sc[...] + jnp.sum(p, axis=1, keepdims=True)

        if h_resident:
            h_blk = h_ref[j]          # (TN, F_PAD) bf16, dynamic first-axis index
        else:
            h_blk = h_ref[...]        # streamed (TN, F_PAD) bf16 block

        # bf16 x bf16 MXU matmul, f32 accumulation.
        acc_sc[...] = alpha * acc_sc[...] + jnp.dot(
            p.astype(h_blk.dtype), h_blk, preferred_element_type=jnp.float32)
        m_sc[...] = m_new

    @pl.when(j == pl.num_programs(1) - 1)
    def _():
        denom = l_sc[...]
        denom = jnp.where(denom > 0.0, denom, 1.0)   # empty rows -> zero output row
        inv = pl.reciprocal(denom, approx=True)      # EUP slot
        inv = inv * (2.0 - denom * inv)              # one Newton step -> ~f32 accuracy
        out_ref[...] = (acc_sc[...] * inv).astype(out_ref.dtype)


# --------------------------------------------------------------------------
# Wrapper
# --------------------------------------------------------------------------
def gat_layer(features, adj, params, *, tm=256, tn=256, lane=128,
              h_resident_budget=8 * 1024 * 1024,
              vmem_limit_bytes=48 * 1024 * 1024):
    """Pallas GATLayer forward (boundary=False path).

    tm/tn default to 256 (multiples of the 256x256 MXU on v6e/v7x; also fine
    on v5e's 4x128x128).  h is kept fully VMEM-resident when it fits
    `h_resident_budget` (bf16), otherwise streamed per column block.
    """
    n, f_in = features.shape
    f_out = params["W"].shape[1]
    f_pad = _round_up(f_out, lane)                 # lane-dense output width
    n_pad = _round_up(n, math.lcm(tm, tn))         # node dim divisible by both tiles
    n_row_blocks = n_pad // tm
    n_col_blocks = n_pad // tn

    # ---- host-side prep (cheap, O(N*F) / O(N^2) mask / O(F^2)); zero-padded
    #      rows/cols are masked out by the zero-padded mask, padded output is
    #      sliced off.  Edge mask built as (adj == 1) BEFORE the int8 cast,
    #      matching np.where(adj == 1) in the PyTorch module.
    x = jnp.pad(features.astype(jnp.float32), ((0, n_pad - n), (0, 0)))
    mask_i8 = jnp.pad((adj == 1).astype(jnp.int8), ((0, n_pad - n), (0, n_pad - n)))
    w_pad = jnp.pad(params["W"].astype(jnp.float32), ((0, 0), (0, f_pad - f_out)))
    b_pad = jnp.pad(params["b"].astype(jnp.float32), ((0, 0), (0, f_pad - f_out)))
    # fold a_1 / a_2 into input-domain weights: s = x @ (W @ a) + (b @ a + a_b)
    a12_w = jnp.concatenate([params["a1_w"], params["a2_w"]], axis=1).astype(jnp.float32)
    a12_b = jnp.concatenate([params["a1_b"], params["a2_b"]], axis=1).astype(jnp.float32)
    wa = params["W"].astype(jnp.float32) @ a12_w                     # [F_in, 2]
    ba = params["b"].astype(jnp.float32) @ a12_w + a12_b             # [1, 2]

    # per-tile edge counts for block-sparsity skipping (scalar-prefetched)
    occ = (mask_i8.astype(jnp.int32)
           .reshape(n_row_blocks, tm, n_col_blocks, tn)
           .sum(axis=(1, 3))
           .reshape(-1))                                             # [rows*cols] int32

    cparams_rows = pltpu.CompilerParams(
        dimension_semantics=("parallel",), vmem_limit_bytes=vmem_limit_bytes)
    cparams_attn = pltpu.CompilerParams(
        dimension_semantics=("parallel", "arbitrary"),
        vmem_limit_bytes=vmem_limit_bytes)

    # ---- Kernel 1: h (padded, lane-dense, bf16) and folded attention projections.
    h_pad, s12 = pl.pallas_call(
        proj_kernel,
        out_shape=(jax.ShapeDtypeStruct((n_pad, f_pad), jnp.bfloat16),
                   jax.ShapeDtypeStruct((n_pad, 2), jnp.float32)),
        grid_spec=pltpu.PrefetchScalarGridSpec(
            num_scalar_prefetch=0, grid=(n_row_blocks,),
            in_specs=[pl.BlockSpec((tm, f_in), lambda i: (i, 0)),
                      pl.BlockSpec((f_in, f_pad), lambda i: (0, 0)),
                      pl.BlockSpec((1, f_pad), lambda i: (0, 0)),
                      pl.BlockSpec((f_in, 2), lambda i: (0, 0)),
                      pl.BlockSpec((1, 2), lambda i: (0, 0))],
            out_specs=[pl.BlockSpec((tm, f_pad), lambda i: (i, 0)),
                       pl.BlockSpec((tm, 2), lambda i: (i, 0))]),
        compiler_params=cparams_rows,
    )(x, w_pad, b_pad, wa, ba)

    s1 = s12[:, 0:1]                 # [Np, 1]
    s2_row = s12[:, 1:2].T           # [1, Np]  (lane-major for sublane broadcast)

    # ---- h placement: fully VMEM-resident (streamed from HBM once) vs streamed.
    h_resident = (n_pad * f_pad * 2) <= h_resident_budget
    if h_resident:
        h_arg = h_pad.reshape(n_col_blocks, tn, f_pad)
        h_spec = pl.BlockSpec((n_col_blocks, tn, f_pad), lambda i, j, occ: (0, 0, 0))
    else:
        h_arg = h_pad
        h_spec = pl.BlockSpec((tn, f_pad), lambda i, j, occ: (j, 0))

    kernel = functools.partial(attn_kernel, n_col_blocks=n_col_blocks,
                               h_resident=h_resident)

    # ---- Kernel 2: tiled masked attention + online softmax + att @ h.
    out_pad = pl.pallas_call(
        kernel,
        out_shape=jax.ShapeDtypeStruct((n_pad, f_pad), jnp.float32),
        grid_spec=pltpu.PrefetchScalarGridSpec(
            num_scalar_prefetch=1,                      # occ table -> SMEM
            grid=(n_row_blocks, n_col_blocks),
            in_specs=[pl.BlockSpec((tm, 1), lambda i, j, occ: (i, 0)),
                      pl.BlockSpec((1, tn), lambda i, j, occ: (0, j)),
                      pl.BlockSpec((tm, tn), lambda i, j, occ: (i, j)),
                      h_spec],
            out_specs=pl.BlockSpec((tm, f_pad), lambda i, j, occ: (i, 0)),
            scratch_shapes=[pltpu.VMEM((tm, 1), jnp.float32),       # running max
                            pltpu.VMEM((tm, 1), jnp.float32),       # running denom
                            pltpu.VMEM((tm, f_pad), jnp.float32)]),  # accumulator
        compiler_params=cparams_attn,
    )(occ, s1, s2_row, mask_i8, h_arg)

    return out_pad[:n, :f_out]


# --------------------------------------------------------------------------
# Reference + test harness
# --------------------------------------------------------------------------
def _linear_init(kw, kb, fan_in, fan_out):
    # mimic nn.Linear default init: U(-1/sqrt(fan_in), 1/sqrt(fan_in))
    bound = 1.0 / jnp.sqrt(jnp.float32(fan_in))
    w = jax.random.uniform(kw, (fan_in, fan_out), jnp.float32, -bound, bound)
    b = jax.random.uniform(kb, (1, fan_out), jnp.float32, -bound, bound)
    return w, b


def _reference(features, adj, p):
    h = features @ p["W"] + p["b"]
    s = (h @ p["a1_w"] + p["a1_b"]) + (h @ p["a2_w"] + p["a2_b"]).T
    s = jnp.where(s >= 0, s, NEG_SLOPE * s)
    mask = adj == 1                      # matches np.where(adj == 1) in the module
    m = jnp.where(mask, s, NEG_INF)
    rm = jnp.max(m, axis=1, keepdims=True)
    ev = jnp.where(mask, jnp.exp(m - rm), 0.0)
    dn = jnp.sum(ev, axis=1, keepdims=True)
    att = ev / jnp.where(dn > 0, dn, 1.0)
    return att @ h


if __name__ == "__main__":
    # N = 384 with 256-tiles -> n_pad = 512, a 2x2 attention grid: exercises
    # padding, multi-tile online softmax accumulation, and the occ table.
    N, F_IN, F_OUT = 384, 64, 32
    key = jax.random.PRNGKey(0)
    ks = jax.random.split(key, 8)

    features = jax.random.normal(ks[0], (N, F_IN), jnp.float32)
    adj = (jax.random.uniform(ks[1], (N, N)) > 0.9).astype(jnp.float32)
    adj = jnp.maximum(adj, jnp.eye(N, dtype=jnp.float32))   # self-loops (no empty rows)

    W, b = _linear_init(ks[2], ks[3], F_IN, F_OUT)           # self.layer
    a1_w, a1_b = _linear_init(ks[4], ks[5], F_OUT, 1)        # self.a_1
    a2_w, a2_b = _linear_init(ks[6], ks[7], F_OUT, 1)        # self.a_2
    params = dict(W=W, b=b, a1_w=a1_w, a1_b=a1_b, a2_w=a2_w, a2_b=a2_b)

    out = gat_layer(features, adj, params)
    jax.block_until_ready(out)

    ref = _reference(features, adj, params)
    assert out.shape == (N, F_OUT)
    # tolerance sized for bf16 h / bf16 edge weights with f32 accumulation
    max_err = jnp.max(jnp.abs(out - ref))
    assert jnp.allclose(out, ref, atol=1e-2, rtol=1e-2), f"mismatch vs reference (max abs err {max_err})"
    print("KERNEL_OK")
</pallas_src>

<mosaic_0001>
module attributes {stable_mosaic.version = 11 : i64} {
  func.func @proj_kernel(%arg0: i32, %arg1: memref<256x64xf32, #tpu.memory_space<vmem>>, %arg2: memref<64x128xf32, #tpu.memory_space<vmem>>, %arg3: memref<1x128xf32, #tpu.memory_space<vmem>>, %arg4: memref<64x2xf32, #tpu.memory_space<vmem>>, %arg5: memref<1x2xf32, #tpu.memory_space<vmem>>, %arg6: memref<256x128xbf16, #tpu.memory_space<vmem>>, %arg7: memref<256x2xf32, #tpu.memory_space<vmem>>) attributes {dimension_semantics = [#tpu.dimension_semantics<parallel>], iteration_bounds = array<i64: 2>, scalar_prefetch = 0 : i64, scratch_operands = 0 : i64, tpu.core_type = #tpu.core_type<tc>, window_params = [{transform_indices = @transform_0, window_bounds = array<i64: 256, 64>}, {pipeline_mode = #tpu.pipeline_mode<synchronous>, transform_indices = @transform_1, window_bounds = array<i64: 64, 128>}, {pipeline_mode = #tpu.pipeline_mode<synchronous>, transform_indices = @transform_2, window_bounds = array<i64: 1, 128>}, {pipeline_mode = #tpu.pipeline_mode<synchronous>, transform_indices = @transform_3, window_bounds = array<i64: 64, 2>}, {pipeline_mode = #tpu.pipeline_mode<synchronous>, transform_indices = @transform_4, window_bounds = array<i64: 1, 2>}, {transform_indices = @transform_5, window_bounds = array<i64: 256, 128>}, {transform_indices = @transform_6, window_bounds = array<i64: 256, 2>}]} {
    %c0 = arith.constant 0 : index
    %c0_0 = arith.constant 0 : index
    %0 = vector.load %arg1[%c0, %c0_0] : memref<256x64xf32, #tpu.memory_space<vmem>>, vector<256x64xf32>
    %c0_1 = arith.constant 0 : index
    %c0_2 = arith.constant 0 : index
    %1 = vector.load %arg2[%c0_1, %c0_2] : memref<64x128xf32, #tpu.memory_space<vmem>>, vector<64x128xf32>
    %cst = arith.constant dense<0.000000e+00> : vector<256x128xf32>
    %2 = tpu.matmul %0, %1, %cst {dimension_numbers = #tpu.dot_dimension_numbers<[1], [0], [0], [1], [0, 0, 1, 1], [], []>} : vector<256x64xf32>, vector<64x128xf32>, vector<256x128xf32> -> vector<256x128xf32>
    %c0_3 = arith.constant 0 : index
    %c0_4 = arith.constant 0 : index
    %3 = vector.load %arg3[%c0_3, %c0_4] : memref<1x128xf32, #tpu.memory_space<vmem>>, vector<1x128xf32>
    %4 = vector.broadcast %3 : vector<1x128xf32> to vector<256x128xf32>
    %5 = arith.addf %2, %4 : vector<256x128xf32>
    %6 = arith.truncf %5 : vector<256x128xf32> to vector<256x128xbf16>
    %c0_5 = arith.constant 0 : index
    %c0_6 = arith.constant 0 : index
    %7 = vector.load %arg6[%c0_5, %c0_6] : memref<256x128xbf16, #tpu.memory_space<vmem>>, vector<256x128xbf16>
    tpu.vector_store %arg6[%c0_5, %c0_6], %6 {strides = array<i32>} : memref<256x128xbf16, #tpu.memory_space<vmem>>, vector<256x128xbf16>,
    %c0_7 = arith.constant 0 : index
    %c0_8 = arith.constant 0 : index
    %8 = vector.load %arg4[%c0_7, %c0_8] : memref<64x2xf32, #tpu.memory_space<vmem>>, vector<64x2xf32>
    %cst_9 = arith.constant dense<0.000000e+00> : vector<256x2xf32>
    %9 = tpu.matmul %0, %8, %cst_9 {dimension_numbers = #tpu.dot_dimension_numbers<[1], [0], [0], [1], [0, 0, 1, 1], [], []>} : vector<256x64xf32>, vector<64x2xf32>, vector<256x2xf32> -> vector<256x2xf32>
    %c0_10 = arith.constant 0 : index
    %c0_11 = arith.constant 0 : index
    %10 = vector.load %arg5[%c0_10, %c0_11] : memref<1x2xf32, #tpu.memory_space<vmem>>, vector<1x2xf32>
    %11 = vector.broadcast %10 : vector<1x2xf32> to vector<256x2xf32>
    %12 = arith.addf %9, %11 : vector<256x2xf32>
    %c0_12 = arith.constant 0 : index
    %c0_13 = arith.constant 0 : index
    %13 = vector.load %arg7[%c0_12, %c0_13] : memref<256x2xf32, #tpu.memory_space<vmem>>, vector<256x2xf32>
    tpu.vector_store %arg7[%c0_12, %c0_13], %12 {strides = array<i32>} : memref<256x2xf32, #tpu.memory_space<vmem>>, vector<256x2xf32>,
    return
  }
  func.func @transform_0(%arg0: i32) -> (i32, i32) {
    %c0_i32 = arith.constant 0 : i32
    %c0_i32_0 = arith.constant 0 : i32
    return %arg0, %c0_i32 : i32, i32
  }
  func.func @transform_1(%arg0: i32) -> (i32, i32) {
    %c0_i32 = arith.constant 0 : i32
    %c0_i32_0 = arith.constant 0 : i32
    %c0_i32_1 = arith.constant 0 : i32
    return %c0_i32, %c0_i32_0 : i32, i32
  }
  func.func @transform_2(%arg0: i32) -> (i32, i32) {
    %c0_i32 = arith.constant 0 : i32
    %c0_i32_0 = arith.constant 0 : i32
    %c0_i32_1 = arith.constant 0 : i32
    return %c0_i32, %c0_i32_0 : i32, i32
  }
  func.func @transform_3(%arg0: i32) -> (i32, i32) {
    %c0_i32 = arith.constant 0 : i32
    %c0_i32_0 = arith.constant 0 : i32
    %c0_i32_1 = arith.constant 0 : i32
    return %c0_i32, %c0_i32_0 : i32, i32
  }
  func.func @transform_4(%arg0: i32) -> (i32, i32) {
    %c0_i32 = arith.constant 0 : i32
    %c0_i32_0 = arith.constant 0 : i32
    %c0_i32_1 = arith.constant 0 : i32
    return %c0_i32, %c0_i32_0 : i32, i32
  }
  func.func @transform_5(%arg0: i32) -> (i32, i32) {
    %c0_i32 = arith.constant 0 : i32
    %c0_i32_0 = arith.constant 0 : i32
    return %arg0, %c0_i32 : i32, i32
  }
  func.func @transform_6(%arg0: i32) -> (i32, i32) {
    %c0_i32 = arith.constant 0 : i32
    %c0_i32_0 = arith.constant 0 : i32
    return %arg0, %c0_i32 : i32, i32
  }
}

</mosaic_0001>

<llo_original>
// kernel: tpu_custom_call.1
$region0: #{tpu_custom_call.1}
  #allocation0 [shape = 'u32[]', space=smem, size = 0x4, offset = 0x4, fixed_abs, tag = 'smem constant byte address 0x4 - core index']
  #allocation1 [shape = 'u32[144,128]{1,0:T(1,128)}', space=vmem, size = 0x12000, scoped, tag = 'internal scratch']
  %s0 = inlined_call_operand.vmem [shape: f32[512,64], index: 0, kind: input, shape index: {}]
  %s1 = inlined_call_operand.vmem [shape: f32[64,128], index: 1, kind: input, shape index: {}]
  %s2 = inlined_call_operand.vmem [shape: f32[1,128], index: 2, kind: input, shape index: {}]
  %s3 = inlined_call_operand.vmem [shape: f32[64,2], index: 3, kind: input, shape index: {}]
  %s4 = inlined_call_operand.vmem [shape: f32[1,2], index: 4, kind: input, shape index: {}]
  %s5 = inlined_call_operand.hbm [shape: bf16[512,128], index: 5, kind: output, shape index: {0}]
  %s6 = inlined_call_operand.vmem [shape: f32[512,2], index: 6, kind: output, shape index: {1}]
  %7 = xla_tuple %s5, %s6
  %s8 = sld [smem:[#allocation0]]
  $region61: #{tpu_custom_call.1} parent=0
    _
  %s10 = ssub.s32 1, %s8
  %s11 = scalar_select 0, %s10, %s8
  $region1: #{tpu_custom_call.1} parent=0
    #allocation2 [shape = 'u8[131072]{0}', space=vmem, size = 0x20000, scoped, tag = 'output window, operand 0']
    #allocation3 [shape = 's32[2]{0}', space=sflag, size = 0x8, scoped, tag = 'scoped memory for tpu_custom_call.1']
    %12 = vsyncpa [#allocation3], 0
    %s13 = scalar_lea.sflag [#allocation3], 1
    %14 = vsyncpa %s13, 0
    loop: start=0, step=1, limit=4
    $region2: #{tpu_custom_call.1} parent=1 // loop_pre_header
      _
    $region3: #{tpu_custom_call.1} parent=1 // loop_header
      %s16 = sphi 0, %s20
      %p17 = scmp.ge.s32.totalorder %s16, 4
      %s26 = sphi 0, %s28
      %s29 = sphi 0, %s26
      %s30 = sphi 0, %s29
      %s46 = sphi 0, %s30
      %s50 = sphi 0, %s50
      %s52 = sphi 0, %s50
      %s53 = sphi 0, %s52
      %s67 = sphi 0, %s53
      %s71 = sphi 0, %s71
      %s73 = sphi 0, %s71
      %s74 = sphi 0, %s73
      %s88 = sphi 0, %s74
      %s92 = sphi 0, %s92
      %s94 = sphi 0, %s92
      %s95 = sphi 0, %s94
      %s109 = sphi 0, %s95
      %s113 = sphi 0, %s113
      %s115 = sphi 0, %s113
      %s116 = sphi 0, %s115
      %s130 = sphi 0, %s116
      %s136 = sphi 0, %s138
      %s139 = sphi 0, %s136
      %s140 = sphi 0, %s139
      %s156 = sphi 0, %s140
      %s162 = sphi 0, %s164
      %s165 = sphi 0, %s162
      %s166 = sphi 0, %s165
      %s182 = sphi 0, %s166
    $region4: #{tpu_custom_call.1} parent=1 // loop_header_branch
      %19 = sbr.rel (%p17) target = $region8
    $region5: #{tpu_custom_call.1} parent=1 // loop_body
      %s21 = ssub.s32 %s16, 1
      %s22 = ssub.s32 %s16, 2
      %s23 = sadd.s32 %s16, 1
      %s24 = ssub.s32 %s16, %s23
      %p25 = scmp.eq.s32.totalorder %s24, 0
      %s27 = sadd.s32 %s26, 1
      %s28 = scalar_select %p25, %s26, %s27
      %p31 = pneg %p25
      %p32 = scmp.eq.s32.totalorder %s16, 1
      %p33 = por %p31, %p32
      %p34 = scmp.ne.s32.totalorder %s26, %s29
      %p35 = scmp.eq.s32.totalorder %s16, 0
      %p36 = por %p34, %p35
      %p37 = scmp.ne.s32.totalorder %s26, %s29
      %p38 = scmp.eq.s32.totalorder %s21, 1
      %p39 = por %p37, %p38
      %p40 = scmp.ne.s32.totalorder %s29, %s30
      %p41 = scmp.eq.s32.totalorder %s21, 0
      %p42 = por %p40, %p41
      %p43 = scmp.ne.s32.totalorder %s29, %s30
      %p44 = scmp.eq.s32.totalorder %s22, 1
      %p45 = por %p43, %p44
      %p47 = scmp.ne.s32.totalorder %s30, %s46
      %p48 = scmp.eq.s32.totalorder %s22, 0
      %p49 = por %p47, %p48
      %s51 = sadd.s32 %s50, 1
      %p54 = scmp.eq.s32.totalorder %s16, 1
      %p55 = scmp.ne.s32.totalorder %s50, %s52
      %p56 = scmp.eq.s32.totalorder %s16, 0
      %p57 = por %p55, %p56
      %p58 = scmp.ne.s32.totalorder %s50, %s52
      %p59 = scmp.eq.s32.totalorder %s21, 1
      %p60 = por %p58, %p59
      %p61 = scmp.ne.s32.totalorder %s52, %s53
      %p62 = scmp.eq.s32.totalorder %s21, 0
      %p63 = por %p61, %p62
      %p64 = scmp.ne.s32.totalorder %s52, %s53
      %p65 = scmp.eq.s32.totalorder %s22, 1
      %p66 = por %p64, %p65
      %p68 = scmp.ne.s32.totalorder %s53, %s67
      %p69 = scmp.eq.s32.totalorder %s22, 0
      %p70 = por %p68, %p69
      %s72 = sadd.s32 %s71, 1
      %p75 = scmp.eq.s32.totalorder %s16, 1
      %p76 = scmp.ne.s32.totalorder %s71, %s73
      %p77 = scmp.eq.s32.totalorder %s16, 0
      %p78 = por %p76, %p77
      %p79 = scmp.ne.s32.totalorder %s71, %s73
      %p80 = scmp.eq.s32.totalorder %s21, 1
      %p81 = por %p79, %p80
      %p82 = scmp.ne.s32.totalorder %s73, %s74
      %p83 = scmp.eq.s32.totalorder %s21, 0
      %p84 = por %p82, %p83
      %p85 = scmp.ne.s32.totalorder %s73, %s74
      %p86 = scmp.eq.s32.totalorder %s22, 1
      %p87 = por %p85, %p86
      %p89 = scmp.ne.s32.totalorder %s74, %s88
      %p90 = scmp.eq.s32.totalorder %s22, 0
      %p91 = por %p89, %p90
      %s93 = sadd.s32 %s92, 1
      %p96 = scmp.eq.s32.totalorder %s16, 1
      %p97 = scmp.ne.s32.totalorder %s92, %s94
      %p98 = scmp.eq.s32.totalorder %s16, 0
      %p99 = por %p97, %p98
      %p100 = scmp.ne.s32.totalorder %s92, %s94
      %p101 = scmp.eq.s32.totalorder %s21, 1
      %p102 = por %p100, %p101
      %p103 = scmp.ne.s32.totalorder %s94, %s95
      %p104 = scmp.eq.s32.totalorder %s21, 0
      %p105 = por %p103, %p104
      %p106 = scmp.ne.s32.totalorder %s94, %s95
      %p107 = scmp.eq.s32.totalorder %s22, 1
      %p108 = por %p106, %p107
      %p110 = scmp.ne.s32.totalorder %s95, %s109
      %p111 = scmp.eq.s32.totalorder %s22, 0
      %p112 = por %p110, %p111
      %s114 = sadd.s32 %s113, 1
      %p117 = scmp.eq.s32.totalorder %s16, 1
      %p118 = scmp.ne.s32.totalorder %s113, %s115
      %p119 = scmp.eq.s32.totalorder %s16, 0
      %p120 = por %p118, %p119
      %p121 = scmp.ne.s32.totalorder %s113, %s115
      %p122 = scmp.eq.s32.totalorder %s21, 1
      %p123 = por %p121, %p122
      %p124 = scmp.ne.s32.totalorder %s115, %s116
      %p125 = scmp.eq.s32.totalorder %s21, 0
      %p126 = por %p124, %p125
      %p127 = scmp.ne.s32.totalorder %s115, %s116
      %p128 = scmp.eq.s32.totalorder %s22, 1
      %p129 = por %p127, %p128
      %p131 = scmp.ne.s32.totalorder %s116, %s130
      %p132 = scmp.eq.s32.totalorder %s22, 0
      %p133 = por %p131, %p132
      %s134 = ssub.s32 %s16, %s23
      %p135 = scmp.eq.s32.totalorder %s134, 0
      %s137 = sadd.s32 %s136, 1
      %s138 = scalar_select %p135, %s136, %s137
      %p141 = pneg %p135
      %p142 = scmp.eq.s32.totalorder %s16, 1
      %p143 = por %p141, %p142
      %p144 = scmp.ne.s32.totalorder %s136, %s139
      %p145 = scmp.eq.s32.totalorder %s16, 0
      %p146 = por %p144, %p145
      %p147 = scmp.ne.s32.totalorder %s136, %s139
      %p148 = scmp.eq.s32.totalorder %s21, 1
      %p149 = por %p147, %p148
      %p150 = scmp.ne.s32.totalorder %s139, %s140
      %p151 = scmp.eq.s32.totalorder %s21, 0
      %p152 = por %p150, %p151
      %p153 = scmp.ne.s32.totalorder %s139, %s140
      %p154 = scmp.eq.s32.totalorder %s22, 1
      %p155 = por %p153, %p154
      %p157 = scmp.ne.s32.totalorder %s140, %s156
      %p158 = scmp.eq.s32.totalorder %s22, 0
      %p159 = por %p157, %p158
      %s160 = ssub.s32 %s16, %s23
      %p161 = scmp.eq.s32.totalorder %s160, 0
      %s163 = sadd.s32 %s162, 1
      %s164 = scalar_select %p161, %s162, %s163
      %p167 = pneg %p161
      %p168 = scmp.eq.s32.totalorder %s16, 1
      %p169 = por %p167, %p168
      %p170 = scmp.ne.s32.totalorder %s162, %s165
      %p171 = scmp.eq.s32.totalorder %s16, 0
      %p172 = por %p170, %p171
      %p173 = scmp.ne.s32.totalorder %s162, %s165
      %p174 = scmp.eq.s32.totalorder %s21, 1
      %p175 = por %p173, %p174
      %p176 = scmp.ne.s32.totalorder %s165, %s166
      %p177 = scmp.eq.s32.totalorder %s21, 0
      %p178 = por %p176, %p177
      %p179 = scmp.ne.s32.totalorder %s165, %s166
      %p180 = scmp.eq.s32.totalorder %s22, 1
      %p181 = por %p179, %p180
      %p183 = scmp.ne.s32.totalorder %s166, %s182
      %p184 = scmp.eq.s32.totalorder %s22, 0
      %p185 = por %p183, %p184
      %p186 = scmp.le.s32.totalorder 1, %s16
      %p187 = scmp.lt.s32.totalorder %s16, 3
      %p188 = pnand %p186, %p187
      %p189 = pneg %p188
      // Predicated region
      $region9: #{tpu_custom_call.1} parent=5 // pred_check
        _
      $region10: #{tpu_custom_call.1} parent=5 // pred_check_branch
        %191 = sbr.rel (%p188) target = $region12
      $region11: #{tpu_custom_call.1} parent=5 // pred_region
        %s192 = ssub.s32 %s16, 1
        // Predicated region
        $region13: #{tpu_custom_call.1} parent=11 // pred_check
          %p193 = pneg %p63
        $region14: #{tpu_custom_call.1} parent=11 // pred_check_branch
          %195 = sbr.rel (%p193) target = $region16
        $region15: #{tpu_custom_call.1} parent=11 // pred_region
          _
        $region16: #{tpu_custom_call.1} parent=11 // pred_fallthru
          _
        // Predicated region
        $region17: #{tpu_custom_call.1} parent=11 // pred_check
          %p196 = pneg %p84
        $region18: #{tpu_custom_call.1} parent=11 // pred_check_branch
          %198 = sbr.rel (%p196) target = $region20
        $region19: #{tpu_custom_call.1} parent=11 // pred_region
          _
        $region20: #{tpu_custom_call.1} parent=11 // pred_fallthru
          _
        // Predicated region
        $region21: #{tpu_custom_call.1} parent=11 // pred_check
          %p199 = pneg %p105
        $region22: #{tpu_custom_call.1} parent=11 // pred_check_branch
          %201 = sbr.rel (%p199) target = $region24
        $region23: #{tpu_custom_call.1} parent=11 // pred_region
          _
        $region24: #{tpu_custom_call.1} parent=11 // pred_fallthru
          _
        // Predicated region
        $region25: #{tpu_custom_call.1} parent=11 // pred_check
          %p202 = pneg %p126
        $region26: #{tpu_custom_call.1} parent=11 // pred_check_branch
          %204 = sbr.rel (%p202) target = $region28
        $region27: #{tpu_custom_call.1} parent=11 // pred_region
          _
        $region28: #{tpu_custom_call.1} parent=11 // pred_fallthru
          _
      $region12: #{tpu_custom_call.1} parent=5 // pred_fallthru
        _
      %p205 = scmp.lt.s32.totalorder %s16, 2
      // Predicated region
      $region29: #{tpu_custom_call.1} parent=5 // pred_check
        %p206 = pneg %p205
      $region30: #{tpu_custom_call.1} parent=5 // pred_check_branch
        %208 = sbr.rel (%p206) target = $region32
      $region31: #{tpu_custom_call.1} parent=5 // pred_region
        // Predicated region
        $region33: #{tpu_custom_call.1} parent=31 // pred_check
          %p209 = pneg %p36
        $region34: #{tpu_custom_call.1} parent=31 // pred_check_branch
          %211 = sbr.rel (%p209) target = $region36
        $region35: #{tpu_custom_call.1} parent=31 // pred_region
          %s212 = smul.u32 32, %s16
          %p213 = scmp.lt.s32.totalorder %s212, 63
          %s214 = scalar_select %p213, %s212, 63
          %s215 = smul.addr %s214, 8
          %s216 = scalar_lea.vmem %s0, %s215
          %s217 = smul.u32 32, %s16
        $region36: #{tpu_custom_call.1} parent=31 // pred_fallthru
          _
      $region32: #{tpu_custom_call.1} parent=5 // pred_fallthru
        _
      %p218 = scmp.le.s32.totalorder 1, %s16
      %p219 = scmp.lt.s32.totalorder %s16, 3
      %p220 = pnand %p218, %p219
      %p221 = pneg %p220
      // Predicated region
      $region37: #{tpu_custom_call.1} parent=5 // pred_check
        _
      $region38: #{tpu_custom_call.1} parent=5 // pred_check_branch
        %223 = sbr.rel (%p220) target = $region40
      $region39: #{tpu_custom_call.1} parent=5 // pred_region
        %s224 = ssub.s32 %s16, 1
        %s225 = smul.u32 32, %s21
        %p226 = scmp.lt.s32.totalorder %s225, 63
        %s227 = scalar_select %p226, %s225, 63
        %s228 = smul.addr %s227, 8
        %s229 = scalar_lea.vmem %s0, %s228
        %p230 = pneg %p42
        %p231 = pneg %p39
        %p232 = pneg %p63
        %p233 = pneg %p60
        %p234 = pneg %p84
        %p235 = pneg %p81
        %p236 = pneg %p105
        %p237 = pneg %p102
        %p238 = pneg %p126
        %p239 = pneg %p123
        %p240 = pneg %p152
        %p241 = pneg %p149
        %s242 = sand.u32 %s139, 1
        %s243 = scalar_lea.sflag [#allocation3], %s242
        %s244 = sand.u32 %s139, 1
        %s245 = smul.addr %s244, 128
        %s246 = scalar_lea.vmem [#allocation2], %s245
        %p247 = pneg %p178
        %p248 = pneg %p175
        %s249 = smul.u32 32, %s21
        %p250 = scmp.lt.s32.totalorder %s249, 63
        %s251 = scalar_select %p250, %s249, 63
        %s252 = smul.addr %s251, 8
        %s253 = scalar_lea.vmem %s6, %s252
        %s254 = smul.u32 32, %s21
        %p255 = scmp.lt.s32.totalorder %s254, 63
        %s256 = scalar_select %p255, %s254, 63
        %s257 = smul.addr %s256, 8
        %s258 = scalar_lea.vmem %s0, %s257
        %s259 = smul.u32 32, %s21
        %s260 = smul.u32 32, %s21
        %s261 = smul.u32 32, %s21
        %p262 = scmp.lt.s32.totalorder %s261, 63
        %s263 = scalar_select %p262, %s261, 63
        %s264 = smul.addr %s263, 8
        %s265 = scalar_lea.vmem %s6, %s264
        %s266 = smul.u32 32, %s21
        %v267 = vld [vmem:[%s258] sm:$0xff]
        %v268 = vld [vmem:[%s258 + $0x8] sm:$0xff]
        %v269 = vld [vmem:[%s258 + $0x10] sm:$0xff]
        %v270 = vld [vmem:[%s258 + $0x18] sm:$0xff]
        %v271 = vld [vmem:[%s258 + $0x20] sm:$0xff]
        %v272 = vld [vmem:[%s258 + $0x28] sm:$0xff]
        %v273 = vld [vmem:[%s258 + $0x30] sm:$0xff]
        %v274 = vld [vmem:[%s258 + $0x38] sm:$0xff]
        %v275 = vld [vmem:[%s258 + $0x40] sm:$0xff]
        %v276 = vld [vmem:[%s258 + $0x48] sm:$0xff]
        %v277 = vld [vmem:[%s258 + $0x50] sm:$0xff]
        %v278 = vld [vmem:[%s258 + $0x58] sm:$0xff]
        %v279 = vld [vmem:[%s258 + $0x60] sm:$0xff]
        %v280 = vld [vmem:[%s258 + $0x68] sm:$0xff]
        %v281 = vld [vmem:[%s258 + $0x70] sm:$0xff]
        %v282 = vld [vmem:[%s258 + $0x78] sm:$0xff]
        %v283 = vld [vmem:[%s258 + $0x80] sm:$0xff]
        %v284 = vld [vmem:[%s258 + $0x88] sm:$0xff]
        %v285 = vld [vmem:[%s258 + $0x90] sm:$0xff]
        %v286 = vld [vmem:[%s258 + $0x98] sm:$0xff]
        %v287 = vld [vmem:[%s258 + $0xa0] sm:$0xff]
        %v288 = vld [vmem:[%s258 + $0xa8] sm:$0xff]
        %v289 = vld [vmem:[%s258 + $0xb0] sm:$0xff]
        %v290 = vld [vmem:[%s258 + $0xb8] sm:$0xff]
        %v291 = vld [vmem:[%s258 + $0xc0] sm:$0xff]
        %v292 = vld [vmem:[%s258 + $0xc8] sm:$0xff]
        %v293 = vld [vmem:[%s258 + $0xd0] sm:$0xff]
        %v294 = vld [vmem:[%s258 + $0xd8] sm:$0xff]
        %v295 = vld [vmem:[%s258 + $0xe0] sm:$0xff]
        %v296 = vld [vmem:[%s258 + $0xe8] sm:$0xff]
        %v297 = vld [vmem:[%s258 + $0xf0] sm:$0xff]
        %v298 = vld [vmem:[%s258 + $0xf8] sm:$0xff]
        %v299 = vld [vmem:[%s1] sm:$0xff]
        %v300 = vld [vmem:[%s1 + $0x8] sm:$0xff]
        %v301 = vld [vmem:[%s1 + $0x10] sm:$0xff]
        %v302 = vld [vmem:[%s1 + $0x18] sm:$0xff]
        %v303 = vld [vmem:[%s1 + $0x20] sm:$0xff]
        %v304 = vld [vmem:[%s1 + $0x28] sm:$0xff]
        %v305 = vld [vmem:[%s1 + $0x30] sm:$0xff]
        %v306 = vld [vmem:[%s1 + $0x38] sm:$0xff]
        %v307 = vld [vmem:[%s2] sm:$0x1]
        %v309 = vlaneseq
        %v310 = vshrl.u32 %v309, 7
        %v311 = vsub.s32 0, %v310
        %v312 = vrot.slane %v307, %v311
        %vm314 = vcmask 523264
        %v316 = vsel %vm314, %v267, 0
        %v319 = vsel %vm314, %v268, 0
        %v322 = vsel %vm314, %v269, 0
        %v325 = vsel %vm314, %v270, 0
        %v328 = vsel %vm314, %v271, 0
        %v331 = vsel %vm314, %v272, 0
        %v334 = vsel %vm314, %v273, 0
        %v337 = vsel %vm314, %v274, 0
        %v340 = vsel %vm314, %v275, 0
        %v343 = vsel %vm314, %v276, 0
        %v346 = vsel %vm314, %v277, 0
        %v349 = vsel %vm314, %v278, 0
        %v352 = vsel %vm314, %v279, 0
        %v355 = vsel %vm314, %v280, 0
        %v358 = vsel %vm314, %v281, 0
        %v361 = vsel %vm314, %v282, 0
        %v364 = vsel %vm314, %v283, 0
        %v367 = vsel %vm314, %v284, 0
        %v370 = vsel %vm314, %v285, 0
        %v373 = vsel %vm314, %v286, 0
        %v376 = vsel %vm314, %v287, 0
        %v379 = vsel %vm314, %v288, 0
        %v382 = vsel %vm314, %v289, 0
        %v385 = vsel %vm314, %v290, 0
        %v388 = vsel %vm314, %v291, 0
        %v391 = vsel %vm314, %v292, 0
        %v394 = vsel %vm314, %v293, 0
        %v397 = vsel %vm314, %v294, 0
        %v400 = vsel %vm314, %v295, 0
        %v403 = vsel %vm314, %v296, 0
        %v406 = vsel %vm314, %v297, 0
        %v409 = vsel %vm314, %v298, 0
        %411 = vmatprep.subr.mxu0 0.0
        %412 = vmatpush1.msra.mxu0 0.0
        %413 = vmatprep.subr.mxu0 0.0
        %414 = vmatpush1.msra.mxu0 0.0
        %415 = vmatprep.subr.mxu0 0.0
        %416 = vmatpush1.msra.mxu0 0.0
        %417 = vmatprep.subr.mxu0 0.0
        %418 = vmatpush1.msra.mxu0 0.0
        %419 = vmatprep.subr.mxu0 0.0
        %420 = vmatpush1.msra.mxu0 0.0
        %421 = vmatprep.subr.mxu0 0.0
        %422 = vmatpush1.msra.mxu0 0.0
        %423 = vmatprep.subr.mxu0 0.0
        %424 = vmatpush1.msra.mxu0 0.0
        %425 = vmatprep.subr.mxu0 0.0
        %426 = vmatpush1.msra.mxu0 0.0
        %427 = vmatprep.subr.mxu0 0.0
        %428 = vmatpush1.msra.mxu0 %v306
        %429 = vmatprep.subr.mxu0 0.0
        %430 = vmatpush1.msra.mxu0 %v305
        %431 = vmatprep.subr.mxu0 0.0
        %432 = vmatpush1.msra.mxu0 %v304
        %433 = vmatprep.subr.mxu0 0.0
        %434 = vmatpush1.msra.mxu0 %v303
        %435 = vmatprep.subr.mxu0 0.0
        %436 = vmatpush1.msra.mxu0 %v302
        %437 = vmatprep.subr.mxu0 0.0
        %438 = vmatpush1.msra.mxu0 %v301
        %439 = vmatprep.subr.mxu0 0.0
        %440 = vmatpush1.msra.mxu0 %v300
        %441 = vmatprep.subr.mxu0 0.0
        %442 = vmatpush1.msra.mxu0 %v299
        %443 = vmatprep.subr.mxu0 0.0
        %444 = vmatpush2.msra.mxu0 0.0
        %445 = vmatprep.subr.mxu0 0.0
        %446 = vmatpush2.msra.mxu0 0.0
        %447 = vmatprep.subr.mxu0 0.0
        %448 = vmatpush2.msra.mxu0 0.0
        %449 = vmatprep.subr.mxu0 0.0
        %450 = vmatpush2.msra.mxu0 0.0
        %451 = vmatprep.subr.mxu0 0.0
        %452 = vmatpush2.msra.mxu0 0.0
        %453 = vmatprep.subr.mxu0 0.0
        %454 = vmatpush2.msra.mxu0 0.0
        %455 = vmatprep.subr.mxu0 0.0
        %456 = vmatpush2.msra.mxu0 0.0
        %457 = vmatprep.subr.mxu0 0.0
        %458 = vmatpush2.msra.mxu0 0.0
        %459 = vmatprep.subr.mxu0 0.0
        %460 = vmatpush2.msra.mxu0 0.0
        %461 = vmatprep.subr.mxu0 0.0
        %462 = vmatpush2.msra.mxu0 0.0
        %463 = vmatprep.subr.mxu0 0.0
        %464 = vmatpush2.msra.mxu0 0.0
        %465 = vmatprep.subr.mxu0 0.0
        %466 = vmatpush2.msra.mxu0 0.0
        %467 = vmatprep.subr.mxu0 0.0
        %468 = vmatpush2.msra.mxu0 0.0
        %469 = vmatprep.subr.mxu0 0.0
        %470 = vmatpush2.msra.mxu0 0.0
        %471 = vmatprep.subr.mxu0 0.0
        %472 = vmatpush2.msra.mxu0 0.0
        %473 = vmatprep.subr.mxu0 0.0
        %474 = vmatpush2.msra.mxu0 0.0
        %475 = vmatprep.mubr.f32.mxu0 0.0
        %476 = vmatmul.mubr.f32.gmra.mxu0 %v316
        %v477 = vpop.f32.mrf.mxu0
        %v478 = vadd.f32 %v312, %v477
        %v479 = vpop.f32.mrf.mxu0
        %480 = vmatprep.mubr.f32.mxu0 0.0
        %481 = vmatmul.mubr.f32.gmra.mxu0 %v319
        %v482 = vpop.f32.mrf.mxu0
        %v483 = vadd.f32 %v312, %v482
        %v484 = vpop.f32.mrf.mxu0
        %485 = vmatprep.mubr.f32.mxu0 0.0
        %486 = vmatmul.mubr.f32.gmra.mxu0 %v322
        %v487 = vpop.f32.mrf.mxu0
        %v488 = vadd.f32 %v312, %v487
        %v489 = vpop.f32.mrf.mxu0
        %490 = vmatprep.mubr.f32.mxu0 0.0
        %491 = vmatmul.mubr.f32.gmra.mxu0 %v325
        %v492 = vpop.f32.mrf.mxu0
        %v493 = vadd.f32 %v312, %v492
        %v494 = vpop.f32.mrf.mxu0
        %495 = vmatprep.mubr.f32.mxu0 0.0
        %496 = vmatmul.mubr.f32.gmra.mxu0 %v328
        %v497 = vpop.f32.mrf.mxu0
        %v498 = vadd.f32 %v312, %v497
        %v499 = vpop.f32.mrf.mxu0
        %500 = vmatprep.mubr.f32.mxu0 0.0
        %501 = vmatmul.mubr.f32.gmra.mxu0 %v331
        %v502 = vpop.f32.mrf.mxu0
        %v503 = vadd.f32 %v312, %v502
        %v504 = vpop.f32.mrf.mxu0
        %505 = vmatprep.mubr.f32.mxu0 0.0
        %506 = vmatmul.mubr.f32.gmra.mxu0 %v334
        %v507 = vpop.f32.mrf.mxu0
        %v508 = vadd.f32 %v312, %v507
        %v509 = vpop.f32.mrf.mxu0
        %510 = vmatprep.mubr.f32.mxu0 0.0
        %511 = vmatmul.mubr.f32.gmra.mxu0 %v337
        %v512 = vpop.f32.mrf.mxu0
        %v513 = vadd.f32 %v312, %v512
        %v514 = vpop.f32.mrf.mxu0
        %515 = vmatprep.mubr.f32.mxu0 0.0
        %516 = vmatmul.mubr.f32.gmra.mxu0 %v340
        %v517 = vpop.f32.mrf.mxu0
        %v518 = vadd.f32 %v312, %v517
        %v519 = vpop.f32.mrf.mxu0
        %520 = vmatprep.mubr.f32.mxu0 0.0
        %521 = vmatmul.mubr.f32.gmra.mxu0 %v343
        %v522 = vpop.f32.mrf.mxu0
        %v523 = vadd.f32 %v312, %v522
        %v524 = vpop.f32.mrf.mxu0
        %525 = vmatprep.mubr.f32.mxu0 0.0
        %526 = vmatmul.mubr.f32.gmra.mxu0 %v346
        %v527 = vpop.f32.mrf.mxu0
        %v528 = vadd.f32 %v312, %v527
        %v529 = vpop.f32.mrf.mxu0
        %530 = vmatprep.mubr.f32.mxu0 0.0
        %531 = vmatmul.mubr.f32.gmra.mxu0 %v349
        %v532 = vpop.f32.mrf.mxu0
        %v533 = vadd.f32 %v312, %v532
        %v534 = vpop.f32.mrf.mxu0
        %535 = vmatprep.mubr.f32.mxu0 0.0
        %536 = vmatmul.mubr.f32.gmra.mxu0 %v352
        %v537 = vpop.f32.mrf.mxu0
        %v538 = vadd.f32 %v312, %v537
        %v539 = vpop.f32.mrf.mxu0
        %540 = vmatprep.mubr.f32.mxu0 0.0
        %541 = vmatmul.mubr.f32.gmra.mxu0 %v355
        %v542 = vpop.f32.mrf.mxu0
        %v543 = vadd.f32 %v312, %v542
        %v544 = vpop.f32.mrf.mxu0
        %545 = vmatprep.mubr.f32.mxu0 0.0
        %546 = vmatmul.mubr.f32.gmra.mxu0 %v358
        %v547 = vpop.f32.mrf.mxu0
        %v548 = vadd.f32 %v312, %v547
        %v549 = vpop.f32.mrf.mxu0
        %550 = vmatprep.mubr.f32.mxu0 0.0
        %551 = vmatmul.mubr.f32.gmra.mxu0 %v361
        %v552 = vpop.f32.mrf.mxu0
        %v553 = vadd.f32 %v312, %v552
        %v554 = vpop.f32.mrf.mxu0
        %555 = vmatprep.mubr.f32.mxu0 0.0
        %556 = vmatmul.mubr.f32.gmra.mxu0 %v364
        %v557 = vpop.f32.mrf.mxu0
        %v558 = vadd.f32 %v312, %v557
        %v559 = vpop.f32.mrf.mxu0
        %560 = vmatprep.mubr.f32.mxu0 0.0
        %561 = vmatmul.mubr.f32.gmra.mxu0 %v367
        %v562 = vpop.f32.mrf.mxu0
        %v563 = vadd.f32 %v312, %v562
        %v564 = vpop.f32.mrf.mxu0
        %565 = vmatprep.mubr.f32.mxu0 0.0
        %566 = vmatmul.mubr.f32.gmra.mxu0 %v370
        %v567 = vpop.f32.mrf.mxu0
        %v568 = vadd.f32 %v312, %v567
        %v569 = vpop.f32.mrf.mxu0
        %570 = vmatprep.mubr.f32.mxu0 0.0
        %571 = vmatmul.mubr.f32.gmra.mxu0 %v373
        %v572 = vpop.f32.mrf.mxu0
        %v573 = vadd.f32 %v312, %v572
        %v574 = vpop.f32.mrf.mxu0
        %575 = vmatprep.mubr.f32.mxu0 0.0
        %576 = vmatmul.mubr.f32.gmra.mxu0 %v376
        %v577 = vpop.f32.mrf.mxu0
        %v578 = vadd.f32 %v312, %v577
        %v579 = vpop.f32.mrf.mxu0
        %580 = vmatprep.mubr.f32.mxu0 0.0
        %581 = vmatmul.mubr.f32.gmra.mxu0 %v379
        %v582 = vpop.f32.mrf.mxu0
        %v583 = vadd.f32 %v312, %v582
        %v584 = vpop.f32.mrf.mxu0
        %585 = vmatprep.mubr.f32.mxu0 0.0
        %586 = vmatmul.mubr.f32.gmra.mxu0 %v382
        %v587 = vpop.f32.mrf.mxu0
        %v588 = vadd.f32 %v312, %v587
        %v589 = vpop.f32.mrf.mxu0
        %590 = vmatprep.mubr.f32.mxu0 0.0
        %591 = vmatmul.mubr.f32.gmra.mxu0 %v385
        %v592 = vpop.f32.mrf.mxu0
        %v593 = vadd.f32 %v312, %v592
        %v594 = vpop.f32.mrf.mxu0
        %595 = vmatprep.mubr.f32.mxu0 0.0
        %596 = vmatmul.mubr.f32.gmra.mxu0 %v388
        %v597 = vpop.f32.mrf.mxu0
        %v598 = vadd.f32 %v312, %v597
        %v599 = vpop.f32.mrf.mxu0
        %600 = vmatprep.mubr.f32.mxu0 0.0
        %601 = vmatmul.mubr.f32.gmra.mxu0 %v391
        %v602 = vpop.f32.mrf.mxu0
        %v603 = vadd.f32 %v312, %v602
        %v604 = vpop.f32.mrf.mxu0
        %605 = vmatprep.mubr.f32.mxu0 0.0
        %606 = vmatmul.mubr.f32.gmra.mxu0 %v394
        %v607 = vpop.f32.mrf.mxu0
        %v608 = vadd.f32 %v312, %v607
        %v609 = vpop.f32.mrf.mxu0
        %610 = vmatprep.mubr.f32.mxu0 0.0
        %611 = vmatmul.mubr.f32.gmra.mxu0 %v397
        %v612 = vpop.f32.mrf.mxu0
        %v613 = vadd.f32 %v312, %v612
        %v614 = vpop.f32.mrf.mxu0
        %615 = vmatprep.mubr.f32.mxu0 0.0
        %616 = vmatmul.mubr.f32.gmra.mxu0 %v400
        %v617 = vpop.f32.mrf.mxu0
        %v618 = vadd.f32 %v312, %v617
        %v619 = vpop.f32.mrf.mxu0
        %620 = vmatprep.mubr.f32.mxu0 0.0
        %621 = vmatmul.mubr.f32.gmra.mxu0 %v403
        %v622 = vpop.f32.mrf.mxu0
        %v623 = vadd.f32 %v312, %v622
        %v624 = vpop.f32.mrf.mxu0
        %625 = vmatprep.mubr.f32.mxu0 0.0
        %626 = vmatmul.mubr.f32.gmra.mxu0 %v406
        %v627 = vpop.f32.mrf.mxu0
        %v628 = vadd.f32 %v312, %v627
        %v629 = vpop.f32.mrf.mxu0
        %630 = vmatprep.mubr.f32.mxu0 0.0
        %631 = vmatmul.mubr.f32.gmra.mxu0 %v409
        %v632 = vpop.f32.mrf.mxu0
        %v633 = vadd.f32 %v312, %v632
        %v634 = vpop.f32.mrf.mxu0
        %635 = vdwg.mxu0
        %v636 = vpack.c.bf16 %v483, %v478
        %v637 = vpack.c.bf16 %v493, %v488
        %v638 = vpack.c.bf16 %v503, %v498
        %v639 = vpack.c.bf16 %v513, %v508
        %v640 = vpack.c.bf16 %v523, %v518
        %v641 = vpack.c.bf16 %v533, %v528
        %v642 = vpack.c.bf16 %v543, %v538
        %v643 = vpack.c.bf16 %v553, %v548
        %v644 = vpack.c.bf16 %v563, %v558
        %v645 = vpack.c.bf16 %v573, %v568
        %v646 = vpack.c.bf16 %v583, %v578
        %v647 = vpack.c.bf16 %v593, %v588
        %v648 = vpack.c.bf16 %v603, %v598
        %v649 = vpack.c.bf16 %v613, %v608
        %v650 = vpack.c.bf16 %v623, %v618
        %v651 = vpack.c.bf16 %v633, %v628
        %v668 = vunpack.c.l.b16 %v636
        %v669 = vunpack.c.h.b16 %v636
        %v670 = vunpack.c.l.b16 %v637
        %v671 = vunpack.c.h.b16 %v637
        %v672 = vunpack.c.l.b16 %v638
        %v673 = vunpack.c.h.b16 %v638
        %v674 = vunpack.c.l.b16 %v639
        %v675 = vunpack.c.h.b16 %v639
        %v676 = vunpack.c.l.b16 %v640
        %v677 = vunpack.c.h.b16 %v640
        %v678 = vunpack.c.l.b16 %v641
        %v679 = vunpack.c.h.b16 %v641
        %v680 = vunpack.c.l.b16 %v642
        %v681 = vunpack.c.h.b16 %v642
        %v682 = vunpack.c.l.b16 %v643
        %v683 = vunpack.c.h.b16 %v643
        %v684 = vunpack.c.l.b16 %v644
        %v685 = vunpack.c.h.b16 %v644
        %v686 = vunpack.c.l.b16 %v645
        %v687 = vunpack.c.h.b16 %v645
        %v688 = vunpack.c.l.b16 %v646
        %v689 = vunpack.c.h.b16 %v646
        %v690 = vunpack.c.l.b16 %v647
        %v691 = vunpack.c.h.b16 %v647
        %v692 = vunpack.c.l.b16 %v648
        %v693 = vunpack.c.h.b16 %v648
        %v694 = vunpack.c.l.b16 %v649
        %v695 = vunpack.c.h.b16 %v649
        %v696 = vunpack.c.l.b16 %v650
        %v697 = vunpack.c.h.b16 %v650
        %v698 = vunpack.c.l.b16 %v651
        %v699 = vunpack.c.h.b16 %v651
        %v700 = vpack.c.b16 %v668, %v668
        %v701 = vpack.c.b16 %v669, %v669
        %v702 = vpack.c.b16 %v670, %v670
        %v703 = vpack.c.b16 %v671, %v671
        %v704 = vpack.c.b16 %v672, %v672
        %v705 = vpack.c.b16 %v673, %v673
        %v706 = vpack.c.b16 %v674, %v674
        %v707 = vpack.c.b16 %v675, %v675
        %v708 = vpack.c.b16 %v676, %v676
        %v709 = vpack.c.b16 %v677, %v677
        %v710 = vpack.c.b16 %v678, %v678
        %v711 = vpack.c.b16 %v679, %v679
        %v712 = vpack.c.b16 %v680, %v680
        %v713 = vpack.c.b16 %v681, %v681
        %v714 = vpack.c.b16 %v682, %v682
        %v715 = vpack.c.b16 %v683, %v683
        %v716 = vpack.c.b16 %v684, %v684
        %v717 = vpack.c.b16 %v685, %v685
        %v718 = vpack.c.b16 %v686, %v686
        %v719 = vpack.c.b16 %v687, %v687
        %v720 = vpack.c.b16 %v688, %v688
        %v721 = vpack.c.b16 %v689, %v689
        %v722 = vpack.c.b16 %v690, %v690
        %v723 = vpack.c.b16 %v691, %v691
        %v724 = vpack.c.b16 %v692, %v692
        %v725 = vpack.c.b16 %v693, %v693
        %v726 = vpack.c.b16 %v694, %v694
        %v727 = vpack.c.b16 %v695, %v695
        %v728 = vpack.c.b16 %v696, %v696
        %v729 = vpack.c.b16 %v697, %v697
        %v730 = vpack.c.b16 %v698, %v698
        %v731 = vpack.c.b16 %v699, %v699
        %764 = vst [vmem:[%s246] sm:$0xf] %v700
        %765 = vst [vmem:[%s246 + $0x4] sm:$0xf] %v701
        %766 = vst [vmem:[%s246 + $0x8] sm:$0xf] %v702
        %767 = vst [vmem:[%s246 + $0xc] sm:$0xf] %v703
        %768 = vst [vmem:[%s246 + $0x10] sm:$0xf] %v704
        %769 = vst [vmem:[%s246 + $0x14] sm:$0xf] %v705
        %770 = vst [vmem:[%s246 + $0x18] sm:$0xf] %v706
        %771 = vst [vmem:[%s246 + $0x1c] sm:$0xf] %v707
        %772 = vst [vmem:[%s246 + $0x20] sm:$0xf] %v708
        %773 = vst [vmem:[%s246 + $0x24] sm:$0xf] %v709
        %774 = vst [vmem:[%s246 + $0x28] sm:$0xf] %v710
        %775 = vst [vmem:[%s246 + $0x2c] sm:$0xf] %v711
        %776 = vst [vmem:[%s246 + $0x30] sm:$0xf] %v712
        %777 = vst [vmem:[%s246 + $0x34] sm:$0xf] %v713
        %778 = vst [vmem:[%s246 + $0x38] sm:$0xf] %v714
        %779 = vst [vmem:[%s246 + $0x3c] sm:$0xf] %v715
        %780 = vst [vmem:[%s246 + $0x40] sm:$0xf] %v716
        %781 = vst [vmem:[%s246 + $0x44] sm:$0xf] %v717
        %782 = vst [vmem:[%s246 + $0x48] sm:$0xf] %v718
        %783 = vst [vmem:[%s246 + $0x4c] sm:$0xf] %v719
        %784 = vst [vmem:[%s246 + $0x50] sm:$0xf] %v720
        %785 = vst [vmem:[%s246 + $0x54] sm:$0xf] %v721
        %786 = vst [vmem:[%s246 + $0x58] sm:$0xf] %v722
        %787 = vst [vmem:[%s246 + $0x5c] sm:$0xf] %v723
        %788 = vst [vmem:[%s246 + $0x60] sm:$0xf] %v724
        %789 = vst [vmem:[%s246 + $0x64] sm:$0xf] %v725
        %790 = vst [vmem:[%s246 + $0x68] sm:$0xf] %v726
        %791 = vst [vmem:[%s246 + $0x6c] sm:$0xf] %v727
        %792 = vst [vmem:[%s246 + $0x70] sm:$0xf] %v728
        %793 = vst [vmem:[%s246 + $0x74] sm:$0xf] %v729
        %794 = vst [vmem:[%s246 + $0x78] sm:$0xf] %v730
        %795 = vst [vmem:[%s246 + $0x7c] sm:$0xf] %v731
        %v796 = vld [vmem:[%s3] sm:$0xff]
        %v797 = vld [vmem:[%s3 + $0x8] sm:$0xff]
        %v798 = vld [vmem:[%s3 + $0x10] sm:$0xff]
        %v799 = vld [vmem:[%s3 + $0x18] sm:$0xff]
        %v800 = vld [vmem:[%s3 + $0x20] sm:$0xff]
        %v801 = vld [vmem:[%s3 + $0x28] sm:$0xff]
        %v802 = vld [vmem:[%s3 + $0x30] sm:$0xff]
        %v803 = vld [vmem:[%s3 + $0x38] sm:$0xff]
        %v804 = vld [vmem:[%s4] sm:$0x1]
        %v806 = vlaneseq
        %v807 = vshrl.u32 %v806, 7
        %v808 = vsub.s32 0, %v807
        %v809 = vrot.slane %v804, %v808
        %811 = vmatprep.subr.mxu0 0.0
        %812 = vmatpush1.msra.mxu0 0.0
        %813 = vmatprep.subr.mxu0 0.0
        %814 = vmatpush1.msra.mxu0 0.0
        %815 = vmatprep.subr.mxu0 0.0
        %816 = vmatpush1.msra.mxu0 0.0
        %817 = vmatprep.subr.mxu0 0.0
        %818 = vmatpush1.msra.mxu0 0.0
        %819 = vmatprep.subr.mxu0 0.0
        %820 = vmatpush1.msra.mxu0 0.0
        %821 = vmatprep.subr.mxu0 0.0
        %822 = vmatpush1.msra.mxu0 0.0
        %823 = vmatprep.subr.mxu0 0.0
        %824 = vmatpush1.msra.mxu0 0.0
        %825 = vmatprep.subr.mxu0 0.0
        %826 = vmatpush1.msra.mxu0 0.0
        %827 = vmatprep.subr.mxu0 0.0
        %828 = vmatpush1.msra.mxu0 %v803
        %829 = vmatprep.subr.mxu0 0.0
        %830 = vmatpush1.msra.mxu0 %v802
        %831 = vmatprep.subr.mxu0 0.0
        %832 = vmatpush1.msra.mxu0 %v801
        %833 = vmatprep.subr.mxu0 0.0
        %834 = vmatpush1.msra.mxu0 %v800
        %835 = vmatprep.subr.mxu0 0.0
        %836 = vmatpush1.msra.mxu0 %v799
        %837 = vmatprep.subr.mxu0 0.0
        %838 = vmatpush1.msra.mxu0 %v798
        %839 = vmatprep.subr.mxu0 0.0
        %840 = vmatpush1.msra.mxu0 %v797
        %841 = vmatprep.subr.mxu0 0.0
        %842 = vmatpush1.msra.mxu0 %v796
        %843 = vmatprep.subr.mxu0 0.0
        %844 = vmatpush2.msra.mxu0 0.0
        %845 = vmatprep.subr.mxu0 0.0
        %846 = vmatpush2.msra.mxu0 0.0
        %847 = vmatprep.subr.mxu0 0.0
        %848 = vmatpush2.msra.mxu0 0.0
        %849 = vmatprep.subr.mxu0 0.0
        %850 = vmatpush2.msra.mxu0 0.0
        %851 = vmatprep.subr.mxu0 0.0
        %852 = vmatpush2.msra.mxu0 0.0
        %853 = vmatprep.subr.mxu0 0.0
        %854 = vmatpush2.msra.mxu0 0.0
        %855 = vmatprep.subr.mxu0 0.0
        %856 = vmatpush2.msra.mxu0 0.0
        %857 = vmatprep.subr.mxu0 0.0
        %858 = vmatpush2.msra.mxu0 0.0
        %859 = vmatprep.subr.mxu0 0.0
        %860 = vmatpush2.msra.mxu0 0.0
        %861 = vmatprep.subr.mxu0 0.0
        %862 = vmatpush2.msra.mxu0 0.0
        %863 = vmatprep.subr.mxu0 0.0
        %864 = vmatpush2.msra.mxu0 0.0
        %865 = vmatprep.subr.mxu0 0.0
        %866 = vmatpush2.msra.mxu0 0.0
        %867 = vmatprep.subr.mxu0 0.0
        %868 = vmatpush2.msra.mxu0 0.0
        %869 = vmatprep.subr.mxu0 0.0
        %870 = vmatpush2.msra.mxu0 0.0
        %871 = vmatprep.subr.mxu0 0.0
        %872 = vmatpush2.msra.mxu0 0.0
        %873 = vmatprep.subr.mxu0 0.0
        %874 = vmatpush2.msra.mxu0 0.0
        %875 = vmatprep.mubr.f32.mxu0 0.0
        %876 = vmatmul.mubr.f32.gmra.mxu0 %v316
        %v877 = vpop.f32.mrf.mxu0
        %v878 = vadd.f32 %v809, %v877
        %v879 = vpop.f32.mrf.mxu0
        %880 = vmatprep.mubr.f32.mxu0 0.0
        %881 = vmatmul.mubr.f32.gmra.mxu0 %v319
        %v882 = vpop.f32.mrf.mxu0
        %v883 = vadd.f32 %v809, %v882
        %v884 = vpop.f32.mrf.mxu0
        %885 = vmatprep.mubr.f32.mxu0 0.0
        %886 = vmatmul.mubr.f32.gmra.mxu0 %v322
        %v887 = vpop.f32.mrf.mxu0
        %v888 = vadd.f32 %v809, %v887
        %v889 = vpop.f32.mrf.mxu0
        %890 = vmatprep.mubr.f32.mxu0 0.0
        %891 = vmatmul.mubr.f32.gmra.mxu0 %v325
        %v892 = vpop.f32.mrf.mxu0
        %v893 = vadd.f32 %v809, %v892
        %v894 = vpop.f32.mrf.mxu0
        %895 = vmatprep.mubr.f32.mxu0 0.0
        %896 = vmatmul.mubr.f32.gmra.mxu0 %v328
        %v897 = vpop.f32.mrf.mxu0
        %v898 = vadd.f32 %v809, %v897
        %v899 = vpop.f32.mrf.mxu0
        %900 = vmatprep.mubr.f32.mxu0 0.0
        %901 = vmatmul.mubr.f32.gmra.mxu0 %v331
        %v902 = vpop.f32.mrf.mxu0
        %v903 = vadd.f32 %v809, %v902
        %v904 = vpop.f32.mrf.mxu0
        %905 = vmatprep.mubr.f32.mxu0 0.0
        %906 = vmatmul.mubr.f32.gmra.mxu0 %v334
        %v907 = vpop.f32.mrf.mxu0
        %v908 = vadd.f32 %v809, %v907
        %v909 = vpop.f32.mrf.mxu0
        %910 = vmatprep.mubr.f32.mxu0 0.0
        %911 = vmatmul.mubr.f32.gmra.mxu0 %v337
        %v912 = vpop.f32.mrf.mxu0
        %v913 = vadd.f32 %v809, %v912
        %v914 = vpop.f32.mrf.mxu0
        %915 = vmatprep.mubr.f32.mxu0 0.0
        %916 = vmatmul.mubr.f32.gmra.mxu0 %v340
        %v917 = vpop.f32.mrf.mxu0
        %v918 = vadd.f32 %v809, %v917
        %v919 = vpop.f32.mrf.mxu0
        %920 = vmatprep.mubr.f32.mxu0 0.0
        %921 = vmatmul.mubr.f32.gmra.mxu0 %v343
        %v922 = vpop.f32.mrf.mxu0
        %v923 = vadd.f32 %v809, %v922
        %v924 = vpop.f32.mrf.mxu0
        %925 = vmatprep.mubr.f32.mxu0 0.0
        %926 = vmatmul.mubr.f32.gmra.mxu0 %v346
        %v927 = vpop.f32.mrf.mxu0
        %v928 = vadd.f32 %v809, %v927
        %v929 = vpop.f32.mrf.mxu0
        %930 = vmatprep.mubr.f32.mxu0 0.0
        %931 = vmatmul.mubr.f32.gmra.mxu0 %v349
        %v932 = vpop.f32.mrf.mxu0
        %v933 = vadd.f32 %v809, %v932
        %v934 = vpop.f32.mrf.mxu0
        %935 = vmatprep.mubr.f32.mxu0 0.0
        %936 = vmatmul.mubr.f32.gmra.mxu0 %v352
        %v937 = vpop.f32.mrf.mxu0
        %v938 = vadd.f32 %v809, %v937
        %v939 = vpop.f32.mrf.mxu0
        %940 = vmatprep.mubr.f32.mxu0 0.0
        %941 = vmatmul.mubr.f32.gmra.mxu0 %v355
        %v942 = vpop.f32.mrf.mxu0
        %v943 = vadd.f32 %v809, %v942
        %v944 = vpop.f32.mrf.mxu0
        %945 = vmatprep.mubr.f32.mxu0 0.0
        %946 = vmatmul.mubr.f32.gmra.mxu0 %v358
        %v947 = vpop.f32.mrf.mxu0
        %v948 = vadd.f32 %v809, %v947
        %v949 = vpop.f32.mrf.mxu0
        %950 = vmatprep.mubr.f32.mxu0 0.0
        %951 = vmatmul.mubr.f32.gmra.mxu0 %v361
        %v952 = vpop.f32.mrf.mxu0
        %v953 = vadd.f32 %v809, %v952
        %v954 = vpop.f32.mrf.mxu0
        %955 = vmatprep.mubr.f32.mxu0 0.0
        %956 = vmatmul.mubr.f32.gmra.mxu0 %v364
        %v957 = vpop.f32.mrf.mxu0
        %v958 = vadd.f32 %v809, %v957
        %v959 = vpop.f32.mrf.mxu0
        %960 = vmatprep.mubr.f32.mxu0 0.0
        %961 = vmatmul.mubr.f32.gmra.mxu0 %v367
        %v962 = vpop.f32.mrf.mxu0
        %v963 = vadd.f32 %v809, %v962
        %v964 = vpop.f32.mrf.mxu0
        %965 = vmatprep.mubr.f32.mxu0 0.0
        %966 = vmatmul.mubr.f32.gmra.mxu0 %v370
        %v967 = vpop.f32.mrf.mxu0
        %v968 = vadd.f32 %v809, %v967
        %v969 = vpop.f32.mrf.mxu0
        %970 = vmatprep.mubr.f32.mxu0 0.0
        %971 = vmatmul.mubr.f32.gmra.mxu0 %v373
        %v972 = vpop.f32.mrf.mxu0
        %v973 = vadd.f32 %v809, %v972
        %v974 = vpop.f32.mrf.mxu0
        %975 = vmatprep.mubr.f32.mxu0 0.0
        %976 = vmatmul.mubr.f32.gmra.mxu0 %v376
        %v977 = vpop.f32.mrf.mxu0
        %v978 = vadd.f32 %v809, %v977
        %v979 = vpop.f32.mrf.mxu0
        %980 = vmatprep.mubr.f32.mxu0 0.0
        %981 = vmatmul.mubr.f32.gmra.mxu0 %v379
        %v982 = vpop.f32.mrf.mxu0
        %v983 = vadd.f32 %v809, %v982
        %v984 = vpop.f32.mrf.mxu0
        %985 = vmatprep.mubr.f32.mxu0 0.0
        %986 = vmatmul.mubr.f32.gmra.mxu0 %v382
        %v987 = vpop.f32.mrf.mxu0
        %v988 = vadd.f32 %v809, %v987
        %v989 = vpop.f32.mrf.mxu0
        %990 = vmatprep.mubr.f32.mxu0 0.0
        %991 = vmatmul.mubr.f32.gmra.mxu0 %v385
        %v992 = vpop.f32.mrf.mxu0
        %v993 = vadd.f32 %v809, %v992
        %v994 = vpop.f32.mrf.mxu0
        %995 = vmatprep.mubr.f32.mxu0 0.0
        %996 = vmatmul.mubr.f32.gmra.mxu0 %v388
        %v997 = vpop.f32.mrf.mxu0
        %v998 = vadd.f32 %v809, %v997
        %v999 = vpop.f32.mrf.mxu0
        %1000 = vmatprep.mubr.f32.mxu0 0.0
        %1001 = vmatmul.mubr.f32.gmra.mxu0 %v391
        %v1002 = vpop.f32.mrf.mxu0
        %v1003 = vadd.f32 %v809, %v1002
        %v1004 = vpop.f32.mrf.mxu0
        %1005 = vmatprep.mubr.f32.mxu0 0.0
        %1006 = vmatmul.mubr.f32.gmra.mxu0 %v394
        %v1007 = vpop.f32.mrf.mxu0
        %v1008 = vadd.f32 %v809, %v1007
        %v1009 = vpop.f32.mrf.mxu0
        %1010 = vmatprep.mubr.f32.mxu0 0.0
        %1011 = vmatmul.mubr.f32.gmra.mxu0 %v397
        %v1012 = vpop.f32.mrf.mxu0
        %v1013 = vadd.f32 %v809, %v1012
        %v1014 = vpop.f32.mrf.mxu0
        %1015 = vmatprep.mubr.f32.mxu0 0.0
        %1016 = vmatmul.mubr.f32.gmra.mxu0 %v400
        %v1017 = vpop.f32.mrf.mxu0
        %v1018 = vadd.f32 %v809, %v1017
        %v1019 = vpop.f32.mrf.mxu0
        %1020 = vmatprep.mubr.f32.mxu0 0.0
        %1021 = vmatmul.mubr.f32.gmra.mxu0 %v403
        %v1022 = vpop.f32.mrf.mxu0
        %v1023 = vadd.f32 %v809, %v1022
        %v1024 = vpop.f32.mrf.mxu0
        %1025 = vmatprep.mubr.f32.mxu0 0.0
        %1026 = vmatmul.mubr.f32.gmra.mxu0 %v406
        %v1027 = vpop.f32.mrf.mxu0
        %v1028 = vadd.f32 %v809, %v1027
        %v1029 = vpop.f32.mrf.mxu0
        %1030 = vmatprep.mubr.f32.mxu0 0.0
        %1031 = vmatmul.mubr.f32.gmra.mxu0 %v409
        %v1032 = vpop.f32.mrf.mxu0
        %v1033 = vadd.f32 %v809, %v1032
        %v1034 = vpop.f32.mrf.mxu0
        %1035 = vdwg.mxu0
        %vm1036 = vcmask 15360
        %1037 = vst.msk [vmem:[%s265] sm:$0xff] %vm1036, %v878
        %1038 = vst.msk [vmem:[%s265 + $0x8] sm:$0xff] %vm1036, %v883
        %1039 = vst.msk [vmem:[%s265 + $0x10] sm:$0xff] %vm1036, %v888
        %1040 = vst.msk [vmem:[%s265 + $0x18] sm:$0xff] %vm1036, %v893
        %1041 = vst.msk [vmem:[%s265 + $0x20] sm:$0xff] %vm1036, %v898
        %1042 = vst.msk [vmem:[%s265 + $0x28] sm:$0xff] %vm1036, %v903
        %1043 = vst.msk [vmem:[%s265 + $0x30] sm:$0xff] %vm1036, %v908
        %1044 = vst.msk [vmem:[%s265 + $0x38] sm:$0xff] %vm1036, %v913
        %1045 = vst.msk [vmem:[%s265 + $0x40] sm:$0xff] %vm1036, %v918
        %1046 = vst.msk [vmem:[%s265 + $0x48] sm:$0xff] %vm1036, %v923
        %1047 = vst.msk [vmem:[%s265 + $0x50] sm:$0xff] %vm1036, %v928
        %1048 = vst.msk [vmem:[%s265 + $0x58] sm:$0xff] %vm1036, %v933
        %1049 = vst.msk [vmem:[%s265 + $0x60] sm:$0xff] %vm1036, %v938
        %1050 = vst.msk [vmem:[%s265 + $0x68] sm:$0xff] %vm1036, %v943
        %1051 = vst.msk [vmem:[%s265 + $0x70] sm:$0xff] %vm1036, %v948
        %1052 = vst.msk [vmem:[%s265 + $0x78] sm:$0xff] %vm1036, %v953
        %1053 = vst.msk [vmem:[%s265 + $0x80] sm:$0xff] %vm1036, %v958
        %1054 = vst.msk [vmem:[%s265 + $0x88] sm:$0xff] %vm1036, %v963
        %1055 = vst.msk [vmem:[%s265 + $0x90] sm:$0xff] %vm1036, %v968
        %1056 = vst.msk [vmem:[%s265 + $0x98] sm:$0xff] %vm1036, %v973
        %1057 = vst.msk [vmem:[%s265 + $0xa0] sm:$0xff] %vm1036, %v978
        %1058 = vst.msk [vmem:[%s265 + $0xa8] sm:$0xff] %vm1036, %v983
        %1059 = vst.msk [vmem:[%s265 + $0xb0] sm:$0xff] %vm1036, %v988
        %1060 = vst.msk [vmem:[%s265 + $0xb8] sm:$0xff] %vm1036, %v993
        %1061 = vst.msk [vmem:[%s265 + $0xc0] sm:$0xff] %vm1036, %v998
        %1062 = vst.msk [vmem:[%s265 + $0xc8] sm:$0xff] %vm1036, %v1003
        %1063 = vst.msk [vmem:[%s265 + $0xd0] sm:$0xff] %vm1036, %v1008
        %1064 = vst.msk [vmem:[%s265 + $0xd8] sm:$0xff] %vm1036, %v1013
        %1065 = vst.msk [vmem:[%s265 + $0xe0] sm:$0xff] %vm1036, %v1018
        %1066 = vst.msk [vmem:[%s265 + $0xe8] sm:$0xff] %vm1036, %v1023
        %1067 = vst.msk [vmem:[%s265 + $0xf0] sm:$0xff] %vm1036, %v1028
        %1068 = vst.msk [vmem:[%s265 + $0xf8] sm:$0xff] %vm1036, %v1033
        %s1069 = sand.u32 %s139, 1
        %s1070 = scalar_lea.sflag [#allocation3], %s1069
        %s1071 = sand.u32 %s139, 1
        %s1072 = smul.addr %s1071, 128
        %s1073 = scalar_lea.vmem [#allocation2], %s1072
        %s1074 = smul.u32 32, %s21
        %p1075 = scmp.lt.s32.totalorder %s1074, 63
        %s1076 = scalar_select %p1075, %s1074, 63
        %s1077 = smul.addr %s1076, 8
        %s1078 = scalar_lea.vmem %s6, %s1077
        // Predicated region
        $region41: #{tpu_custom_call.1} parent=39 // pred_check
          %p1079 = pneg %p149
        $region42: #{tpu_custom_call.1} parent=39 // pred_check_branch
          %1081 = sbr.rel (%p1079) target = $region44
        $region43: #{tpu_custom_call.1} parent=39 // pred_region
          %s1082 = smul.u32 32, %s21
          %s1084 = ssub.s32 2048, 2048
          %1085 = vsyncadd %s1070, %s1084
          %s1086 = smul.addr %s1082, 64
          %s1087 = scalar_lea.hbm %s5, %s1086
          %s1088 = sshll.u32 %s1073, 4
          %s1089 = int_to_ptr.vmem [resolvable:$true] %s1088
          %1094 = dma.vmem_to_hbm [thread:$0]  %s1089, 2048, %s1087, %s1070, 64, 64, 4
        $region44: #{tpu_custom_call.1} parent=39 // pred_fallthru
          _
        // Predicated region
        $region45: #{tpu_custom_call.1} parent=39 // pred_check
          %p1095 = pneg %p175
        $region46: #{tpu_custom_call.1} parent=39 // pred_check_branch
          %1097 = sbr.rel (%p1095) target = $region48
        $region47: #{tpu_custom_call.1} parent=39 // pred_region
          %s1098 = smul.u32 32, %s21
        $region48: #{tpu_custom_call.1} parent=39 // pred_fallthru
          _
      $region40: #{tpu_custom_call.1} parent=5 // pred_fallthru
        _
      %p1099 = scmp.le.s32.totalorder 2, %s16
      // Predicated region
      $region49: #{tpu_custom_call.1} parent=5 // pred_check
        %p1100 = pneg %p1099
      $region50: #{tpu_custom_call.1} parent=5 // pred_check_branch
        %1102 = sbr.rel (%p1100) target = $region52
      $region51: #{tpu_custom_call.1} parent=5 // pred_region
        %s1103 = ssub.s32 %s16, 2
        // Predicated region
        $region53: #{tpu_custom_call.1} parent=51 // pred_check
          %p1104 = pneg %p155
        $region54: #{tpu_custom_call.1} parent=51 // pred_check_branch
          %1106 = sbr.rel (%p1104) target = $region56
        $region55: #{tpu_custom_call.1} parent=51 // pred_region
          %s1107 = sand.u32 %s140, 1
          %s1108 = scalar_lea.sflag [#allocation3], %s1107
          %s1109 = sand.u32 %s140, 1
          %s1110 = smul.addr %s1109, 128
          %s1111 = scalar_lea.vmem [#allocation2], %s1110
          %1112 = dma.done %s1108, 2048
        $region56: #{tpu_custom_call.1} parent=51 // pred_fallthru
          _
        // Predicated region
        $region57: #{tpu_custom_call.1} parent=51 // pred_check
          %p1113 = pneg %p181
        $region58: #{tpu_custom_call.1} parent=51 // pred_check_branch
          %1115 = sbr.rel (%p1113) target = $region60
        $region59: #{tpu_custom_call.1} parent=51 // pred_region
          %s1116 = smul.u32 32, %s22
          %p1117 = scmp.lt.s32.totalorder %s1116, 63
          %s1118 = scalar_select %p1117, %s1116, 63
          %s1119 = smul.addr %s1118, 8
          %s1120 = scalar_lea.vmem %s6, %s1119
        $region60: #{tpu_custom_call.1} parent=51 // pred_fallthru
          _
      $region52: #{tpu_custom_call.1} parent=5 // pred_fallthru
        _
    $region6: #{tpu_custom_call.1} parent=1 // loop_footer
      %s20 = sadd.s32 1, %s16
    $region7: #{tpu_custom_call.1} parent=1 // loop_footer_branch
      %15 = sbr.rel target = $region3
    $region8: #{tpu_custom_call.1} parent=1 // loop_exit
      _
    %1121 = vsyncpa [#allocation3], 1
    %s1122 = scalar_lea.sflag [#allocation3], 1
    %1123 = vsyncpa %s1122, 1

</llo_original>
